<compile_context>
chip_gen: v7x
topology: tpu7x:2x2x1
jax: 0.10.0
libtpu: 0.0.40
codegen_flags: <defaults>
</compile_context>

<pallas_src>
import functools

import jax
import jax.numpy as jnp
from jax import lax
from jax.experimental import pallas as pl
from jax.experimental.pallas import tpu as pltpu

_LANE = 128
_SUBLANE = 8


def _round_up(x, m):
    return (x + m - 1) // m * m


# ---------------------------------------------------------------------------
# Generation-aware hardware queries (VMEM budget / megacore detection).
# ---------------------------------------------------------------------------
def _vmem_capacity_bytes():
    """Physical VMEM per core; conservative (v7x-sized) fallback."""
    try:
        info = pltpu.get_tpu_info()
        cap = int(getattr(info, "vmem_capacity_bytes", 0) or 0)
        if cap > 0:
            return cap
    except Exception:
        pass
    return 64 * 1024 * 1024


def _num_tensorcores():
    """Best-effort TensorCores-per-chip (megacore) detection."""
    try:
        kind = jax.devices()[0].device_kind.lower()
    except Exception:
        return 2
    return 2 if any(t in kind for t in ("v4", "v5p", "v7", "tpu7", "7x")) else 1


# ---------------------------------------------------------------------------
# Excitation: pooled (N, C) -> gate (N, C), all in f32.
# ---------------------------------------------------------------------------
def _excitation(pooled, w1t_ref, b1_ref, w2t_ref, b2_ref, use_mxu):
    w1t = w1t_ref[...].astype(jnp.float32)        # (C, Cse)
    w2t = w2t_ref[...].astype(jnp.float32)        # (Cse, C)
    b1 = b1_ref[...].astype(jnp.float32)          # (1, Cse)
    b2 = b2_ref[...].astype(jnp.float32)          # (1, C)
    if use_mxu:
        mm = lambda a, b: jnp.dot(a, b, preferred_element_type=jnp.float32)
    else:
        # Tiny channel dims: VPU broadcast-multiply + reduce (no MXU needed).
        mm = lambda a, b: jnp.sum(a[:, :, None] * b[None, :, :], axis=1)
    y1 = jnp.maximum(mm(pooled, w1t) + b1, 0.0)
    return jax.nn.sigmoid(mm(y1, w2t) + b2)


# ---------------------------------------------------------------------------
# Fused single-pass kernel: whole (Bt, C, HW) / (Bt, HW, C) tile in VMEM.
# ---------------------------------------------------------------------------
def _se_fused_kernel(spatial_axis, use_mxu,
                     x_ref, w1t_ref, b1_ref, w2t_ref, b2_ref, o_ref):
    inv_hw = 1.0 / x_ref.shape[spatial_axis]

    # squeeze: global average pool over the flattened spatial dim (f32 acc).
    pooled = jnp.sum(x_ref[...].astype(jnp.float32), axis=spatial_axis) * inv_hw  # (Bt, C)

    # excitation: conv1x1 -> ReLU -> conv1x1 -> sigmoid.
    gate = _excitation(pooled, w1t_ref, b1_ref, w2t_ref, b2_ref, use_mxu)
    gate = gate.astype(o_ref.dtype)   # native-dtype streaming multiply (bf16 stays bf16)

    if spatial_axis == 2:             # NCHW view: channels on sublanes, HW on lanes
        o_ref[...] = x_ref[...] * gate[:, :, None]
    else:                             # NHWC view: HW on sublanes, channels on lanes
        o_ref[...] = x_ref[...] * gate[:, None, :]


# ---------------------------------------------------------------------------
# Two-phase HW-tiled fallback.  grid = (B, phase, cdiv(HW, hw_tile)):
#   phase 0 accumulates the masked pool sum, phase 1 computes the gate once
#   (h == 0) and applies it tile by tile.  Partial last tiles are legal:
#   reads are masked, out-of-bounds writes are dropped by Pallas.
# ---------------------------------------------------------------------------
def _se_tiled_kernel(spatial_axis, use_mxu, hw_total, hw_tile, needs_mask,
                     x_ref, w1t_ref, b1_ref, w2t_ref, b2_ref, o_ref, acc_ref):
    phase = pl.program_id(1)
    h = pl.program_id(2)

    @pl.when((phase == 0) & (h == 0))
    def _():
        acc_ref[...] = jnp.zeros_like(acc_ref)

    @pl.when(phase == 0)
    def _():
        xv = x_ref[...].astype(jnp.float32)
        if needs_mask:  # trace-time flag: mask the partial last spatial tile
            pos = h * hw_tile + lax.broadcasted_iota(jnp.int32, xv.shape, spatial_axis)
            xv = jnp.where(pos < hw_total, xv, 0.0)
        acc_ref[...] += jnp.sum(xv, axis=spatial_axis)                        # (1, C)

    @pl.when((phase == 1) & (h == 0))
    def _():
        pooled = acc_ref[...] * (1.0 / hw_total)                              # (1, C)
        acc_ref[...] = _excitation(pooled, w1t_ref, b1_ref, w2t_ref, b2_ref,
                                   use_mxu)                                   # reuse as gate

    @pl.when(phase == 1)
    def _():
        gate = acc_ref[...].astype(o_ref.dtype)                               # (1, C)
        if spatial_axis == 2:
            o_ref[...] = x_ref[...] * gate[:, :, None]
        else:
            o_ref[...] = x_ref[...] * gate[:, None, :]


# ---------------------------------------------------------------------------
# Tile-size selection.
# ---------------------------------------------------------------------------
def _pick_bt(B, per_batch_bytes, budget_bytes, num_tc):
    """Largest divisor of B whose fused-tile footprint fits the budget.  On
    2-TC (megacore) parts keep >= 2 grid steps so the batch axis can shard
    across cores; on single-TC chips let the tile grow (fewer grid steps,
    bigger DMA bursts)."""
    max_bt = max(1, budget_bytes // max(per_batch_bytes, 1))
    cap = B
    if num_tc >= 2 and B >= 2:
        cap = max(1, B // 2)
    bt = 1
    for d in range(1, B + 1):
        if B % d == 0 and d <= max_bt and d <= cap:
            bt = d
    return bt


def _pick_hw_tile(HW, align, bytes_per_spatial, budget_bytes):
    """Largest `align`-aligned spatial tile (<= HW) whose per-step footprint
    fits the budget.  Does NOT require dividing HW (partial tile is masked)."""
    if HW <= align:
        return HW
    max_tile = budget_bytes // max(bytes_per_spatial, 1)
    tile = (min(max_tile, HW) // align) * align
    return max(tile, align)


# ---------------------------------------------------------------------------
# Wrapper.
# ---------------------------------------------------------------------------
def se_module(x, w1, b1, w2, b2, *, data_format="NCHW", tile_vmem_budget_bytes=None):
    """SEModule forward.

    data_format="NCHW": x is (B, C, H, W)  (matches the PyTorch module).
    data_format="NHWC": x is (B, H, W, C)  (channels-last; lane-dense output
        for small / non-128-multiple H*W when C is a lane multiple).
    w1: (Cse, C); b1: (Cse,); w2: (C, Cse); b2: (C,).

    Works for f32 or bf16 x: the pool/excitation accumulate in f32, the
    streaming multiply and I/O keep x.dtype, so bf16 I/O halves HBM traffic.
    """
    if data_format == "NCHW":
        B, C, H, W = x.shape
        spatial_axis = 2
    elif data_format == "NHWC":
        B, H, W, C = x.shape
        spatial_axis = 1
    else:
        raise ValueError(f"unsupported data_format: {data_format!r}")

    Cse = w1.shape[0]
    HW = H * W
    itemsize = jnp.dtype(x.dtype).itemsize
    use_mxu = (C * Cse) >= _LANE * _LANE

    if data_format == "NCHW":
        x_flat = x.reshape(B, C, HW)
        chan_pad, spat_pad = _round_up(C, _SUBLANE), _round_up(HW, _LANE)
        hw_align = _LANE
        block3 = lambda bt, hw: (bt, C, hw)
        x_idx_tiled = lambda b, p, h: (b, 0, h)
        o_idx_tiled = lambda b, p, h: (b, 0, h * p)
    else:
        x_flat = x.reshape(B, HW, C)
        chan_pad, spat_pad = _round_up(C, _LANE), _round_up(HW, _SUBLANE)
        hw_align = _SUBLANE
        block3 = lambda bt, hw: (bt, hw, C)
        x_idx_tiled = lambda b, p, h: (b, h, 0)
        o_idx_tiled = lambda b, p, h: (b, h * p, 0)

    # Generation-aware VMEM sizing: budget ~ 0.5x physical, compiler limit ~0.75x.
    vmem_cap = _vmem_capacity_bytes()
    budget = (tile_vmem_budget_bytes if tile_vmem_budget_bytes is not None
              else vmem_cap // 2)
    vmem_limit = (vmem_cap * 3) // 4

    # Plain-JAX glue: transpose weights so the kernel does row-major matmuls.
    w1t = jnp.transpose(w1)            # (C, Cse)
    w2t = jnp.transpose(w2)            # (Cse, C)
    b1_2d = b1.reshape(1, Cse)
    b2_2d = b2.reshape(1, C)

    weight_specs = lambda idx_map: [
        pl.BlockSpec((C, Cse), idx_map),
        pl.BlockSpec((1, Cse), idx_map),
        pl.BlockSpec((Cse, C), idx_map),
        pl.BlockSpec((1, C), idx_map),
    ]
    weight_bytes = (2 * C * Cse + C + Cse) * jnp.dtype(w1.dtype).itemsize
    flops = 2 * B * C * HW + 4 * B * C * Cse

    compiler_params = lambda sem: pltpu.CompilerParams(
        dimension_semantics=sem, vmem_limit_bytes=vmem_limit)

    # Per-batch VMEM footprint of a fused tile, padded to the (8,128) tiling:
    # double-buffered in + out in x.dtype plus one f32 temp for the pool cast.
    per_batch_bytes = chan_pad * spat_pad * (4 * itemsize + 4)

    if per_batch_bytes <= budget:
        # ---- fused single-read path (x read once, written once) ------------
        bt = _pick_bt(B, per_batch_bytes, budget, _num_tensorcores())
        cost = pl.CostEstimate(
            flops=flops, transcendentals=B * C,
            bytes_accessed=2 * B * C * HW * itemsize + weight_bytes)
        out_flat = pl.pallas_call(
            functools.partial(_se_fused_kernel, spatial_axis, use_mxu),
            out_shape=jax.ShapeDtypeStruct(x_flat.shape, x.dtype),
            grid_spec=pltpu.PrefetchScalarGridSpec(
                num_scalar_prefetch=0,
                grid=(B // bt,),
                in_specs=[pl.BlockSpec(block3(bt, HW), lambda b: (b, 0, 0))]
                + weight_specs(lambda b: (0, 0)),
                out_specs=pl.BlockSpec(block3(bt, HW), lambda b: (b, 0, 0)),
            ),
            compiler_params=compiler_params(("parallel",)),
            cost_estimate=cost,
        )(x_flat, w1t, b1_2d, w2t, b2_2d)
    else:
        # ---- two-phase HW-tiled fallback (x read twice: pool, then scale) --
        bytes_per_spatial = chan_pad * (4 * itemsize + 8)  # +8: f32 temp + mask temp
        hw_tile = _pick_hw_tile(HW, hw_align, bytes_per_spatial, budget)
        nh = pl.cdiv(HW, hw_tile)
        needs_mask = (HW % hw_tile) != 0
        cost = pl.CostEstimate(
            flops=flops, transcendentals=B * C,
            bytes_accessed=3 * B * C * HW * itemsize + weight_bytes)
        out_flat = pl.pallas_call(
            functools.partial(_se_tiled_kernel, spatial_axis, use_mxu,
                              HW, hw_tile, needs_mask),
            out_shape=jax.ShapeDtypeStruct(x_flat.shape, x.dtype),
            grid_spec=pltpu.PrefetchScalarGridSpec(
                num_scalar_prefetch=0,
                grid=(B, 2, nh),
                in_specs=[pl.BlockSpec(block3(1, hw_tile), x_idx_tiled)]
                + weight_specs(lambda b, p, h: (0, 0)),
                # Output block index held at the first tile during phase 0
                # (nothing written), tracks the spatial tile during phase 1.
                out_specs=pl.BlockSpec(block3(1, hw_tile), o_idx_tiled),
                scratch_shapes=[pltpu.VMEM((1, C), jnp.float32)],
            ),
            compiler_params=compiler_params(("parallel", "arbitrary", "arbitrary")),
            cost_estimate=cost,
        )(x_flat, w1t, b1_2d, w2t, b2_2d)

    return out_flat.reshape(x.shape)


def se_module_ref(x, w1, b1, w2, b2, *, data_format="NCHW"):
    """Pure-JAX reference matching the PyTorch forward (computed in f32)."""
    xf = x.astype(jnp.float32)
    if data_format == "NCHW":
        pooled = jnp.mean(xf, axis=(2, 3))                   # (B, C)
    else:
        pooled = jnp.mean(xf, axis=(1, 2))                   # (B, C)
    y1 = jnp.maximum(pooled @ w1.T + b1, 0.0)                # (B, Cse)
    y2 = jax.nn.sigmoid(y1 @ w2.T + b2)                      # (B, C)
    if data_format == "NCHW":
        return xf * y2[:, :, None, None]
    return xf * y2[:, None, None, :]


if __name__ == "__main__":
    key = jax.random.PRNGKey(0)
    ks = jax.random.split(key, 12)

    # --- 1) small NCHW shapes, f32 I/O (fused single-read path) -------------
    B, C, Cse, H, W = 2, 4, 2, 16, 16
    x = jax.random.normal(ks[0], (B, C, H, W), dtype=jnp.float32)
    w1 = jax.random.normal(ks[1], (Cse, C), dtype=jnp.float32) * 0.5
    b1 = jax.random.normal(ks[2], (Cse,), dtype=jnp.float32) * 0.1
    w2 = jax.random.normal(ks[3], (C, Cse), dtype=jnp.float32) * 0.5
    b2 = jax.random.normal(ks[4], (C,), dtype=jnp.float32) * 0.1

    out = jax.block_until_ready(se_module(x, w1, b1, w2, b2))
    ref = se_module_ref(x, w1, b1, w2, b2)
    assert out.shape == x.shape and out.dtype == x.dtype
    assert jnp.allclose(out, ref, atol=1e-5, rtol=1e-5), "fused NCHW f32 mismatch"

    # --- 2) bf16 I/O on the same shapes (halves HBM traffic; caller-side) ---
    x_bf = x.astype(jnp.bfloat16)
    out_bf = jax.block_until_ready(se_module(x_bf, w1, b1, w2, b2))
    assert out_bf.dtype == jnp.bfloat16
    assert jnp.allclose(out_bf.astype(jnp.float32), ref, atol=8e-2, rtol=8e-2), \
        "fused NCHW bf16 mismatch"

    # --- 3) two-phase HW-tiled fallback with HW NOT a multiple of 128 -------
    #     (forced via a tiny budget; exercises the masked partial-tile pool)
    B2, C2, Cse2, H2, W2 = 2, 8, 4, 24, 24   # HW = 576 = 4*128 + 64
    x2 = jax.random.normal(ks[5], (B2, C2, H2, W2), dtype=jnp.float32)
    w1b = jax.random.normal(ks[6], (Cse2, C2), dtype=jnp.float32) * 0.5
    b1b = jax.random.normal(ks[7], (Cse2,), dtype=jnp.float32) * 0.1
    w2b = jax.random.normal(ks[8], (C2, Cse2), dtype=jnp.float32) * 0.5
    b2b = jax.random.normal(ks[9], (C2,), dtype=jnp.float32) * 0.1
    out2 = jax.block_until_ready(
        se_module(x2, w1b, b1b, w2b, b2b, tile_vmem_budget_bytes=64 * 1024))
    ref2 = se_module_ref(x2, w1b, b1b, w2b, b2b)
    assert jnp.allclose(out2, ref2, atol=1e-5, rtol=1e-5), "tiled NCHW mismatch"

    # --- 4) channels-last (NHWC) path: lane-dense output for small HW -------
    B3, C3, H3, W3 = 2, 8, 7, 7              # HW = 49 (not a lane multiple)
    x3 = jax.random.normal(ks[10], (B3, H3, W3, C3), dtype=jnp.float32)
    out3 = jax.block_until_ready(
        se_module(x3, w1b, b1b, w2b, b2b, data_format="NHWC"))
    ref3 = se_module_ref(x3, w1b, b1b, w2b, b2b, data_format="NHWC")
    assert jnp.allclose(out3, ref3, atol=1e-5, rtol=1e-5), "fused NHWC mismatch"

    # --- 5) NHWC two-phase fallback with a partial last spatial tile --------
    out4 = jax.block_until_ready(
        se_module(x3, w1b, b1b, w2b, b2b, data_format="NHWC",
                  tile_vmem_budget_bytes=4 * 1024))
    assert jnp.allclose(out4, ref3, atol=1e-5, rtol=1e-5), "tiled NHWC mismatch"

    print("KERNEL_OK")
</pallas_src>

<mosaic_0001>
module attributes {stable_mosaic.version = 11 : i64} {
  func.func @_se_fused_kernel(%arg0: i32, %arg1: memref<2x4x256xf32, #tpu.memory_space<vmem>>, %arg2: memref<4x2xf32, #tpu.memory_space<vmem>>, %arg3: memref<1x2xf32, #tpu.memory_space<vmem>>, %arg4: memref<2x4xf32, #tpu.memory_space<vmem>>, %arg5: memref<1x4xf32, #tpu.memory_space<vmem>>, %arg6: memref<2x4x256xf32, #tpu.memory_space<vmem>>) attributes {dimension_semantics = [#tpu.dimension_semantics<parallel>], iteration_bounds = array<i64: 1>, scalar_prefetch = 0 : i64, scratch_operands = 0 : i64, tpu.core_type = #tpu.core_type<tc>, window_params = [{transform_indices = @transform_0, window_bounds = array<i64: 2, 4, 256>}, {pipeline_mode = #tpu.pipeline_mode<synchronous>, transform_indices = @transform_1, window_bounds = array<i64: 4, 2>}, {pipeline_mode = #tpu.pipeline_mode<synchronous>, transform_indices = @transform_2, window_bounds = array<i64: 1, 2>}, {pipeline_mode = #tpu.pipeline_mode<synchronous>, transform_indices = @transform_3, window_bounds = array<i64: 2, 4>}, {pipeline_mode = #tpu.pipeline_mode<synchronous>, transform_indices = @transform_4, window_bounds = array<i64: 1, 4>}, {transform_indices = @transform_5, window_bounds = array<i64: 2, 4, 256>}]} {
    %c0 = arith.constant 0 : index
    %c0_0 = arith.constant 0 : index
    %c0_1 = arith.constant 0 : index
    %0 = vector.load %arg1[%c0, %c0_0, %c0_1] : memref<2x4x256xf32, #tpu.memory_space<vmem>>, vector<2x4x256xf32>
    %cst = arith.constant dense<0.000000e+00> : vector<2x4xf32>
    %1 = vector.multi_reduction <add>, %0, %cst [2] : vector<2x4x256xf32> to vector<2x4xf32>
    %cst_2 = arith.constant 3.906250e-03 : f32
    %2 = vector.broadcast %cst_2 : f32 to vector<2x4xf32>
    %3 = arith.mulf %1, %2 : vector<2x4xf32>
    %c0_3 = arith.constant 0 : index
    %c0_4 = arith.constant 0 : index
    %4 = vector.load %arg2[%c0_3, %c0_4] : memref<4x2xf32, #tpu.memory_space<vmem>>, vector<4x2xf32>
    %c0_5 = arith.constant 0 : index
    %c0_6 = arith.constant 0 : index
    %5 = vector.load %arg4[%c0_5, %c0_6] : memref<2x4xf32, #tpu.memory_space<vmem>>, vector<2x4xf32>
    %c0_7 = arith.constant 0 : index
    %c0_8 = arith.constant 0 : index
    %6 = vector.load %arg3[%c0_7, %c0_8] : memref<1x2xf32, #tpu.memory_space<vmem>>, vector<1x2xf32>
    %c0_9 = arith.constant 0 : index
    %c0_10 = arith.constant 0 : index
    %7 = vector.load %arg5[%c0_9, %c0_10] : memref<1x4xf32, #tpu.memory_space<vmem>>, vector<1x4xf32>
    %8 = vector.shape_cast %3 : vector<2x4xf32> to vector<2x4x1xf32>
    %9 = vector.shape_cast %4 : vector<4x2xf32> to vector<1x4x2xf32>
    %10 = vector.broadcast %8 : vector<2x4x1xf32> to vector<2x4x2xf32>
    %11 = vector.broadcast %9 : vector<1x4x2xf32> to vector<2x4x2xf32>
    %12 = arith.mulf %10, %11 : vector<2x4x2xf32>
    %cst_11 = arith.constant dense<0.000000e+00> : vector<2x2xf32>
    %13 = vector.multi_reduction <add>, %12, %cst_11 [1] : vector<2x4x2xf32> to vector<2x2xf32>
    %14 = vector.broadcast %6 : vector<1x2xf32> to vector<2x2xf32>
    %15 = arith.addf %13, %14 : vector<2x2xf32>
    %cst_12 = arith.constant 0.000000e+00 : f32
    %16 = vector.broadcast %cst_12 : f32 to vector<2x2xf32>
    %17 = arith.maximumf %15, %16 : vector<2x2xf32>
    %18 = vector.shape_cast %17 : vector<2x2xf32> to vector<2x2x1xf32>
    %19 = vector.shape_cast %5 : vector<2x4xf32> to vector<1x2x4xf32>
    %20 = vector.broadcast %18 : vector<2x2x1xf32> to vector<2x2x4xf32>
    %21 = vector.broadcast %19 : vector<1x2x4xf32> to vector<2x2x4xf32>
    %22 = arith.mulf %20, %21 : vector<2x2x4xf32>
    %cst_13 = arith.constant dense<0.000000e+00> : vector<2x4xf32>
    %23 = vector.multi_reduction <add>, %22, %cst_13 [1] : vector<2x2x4xf32> to vector<2x4xf32>
    %24 = vector.broadcast %7 : vector<1x4xf32> to vector<2x4xf32>
    %25 = arith.addf %23, %24 : vector<2x4xf32>
    %26 = arith.negf %25 : vector<2x4xf32>
    %27 = math.exp %26 : vector<2x4xf32>
    %cst_14 = arith.constant 1.000000e+00 : f32
    %28 = vector.broadcast %cst_14 : f32 to vector<2x4xf32>
    %29 = arith.addf %28, %27 : vector<2x4xf32>
    %30 = arith.divf %28, %29 : vector<2x4xf32>
    %c0_15 = arith.constant 0 : index
    %c0_16 = arith.constant 0 : index
    %c0_17 = arith.constant 0 : index
    %31 = vector.load %arg1[%c0_15, %c0_16, %c0_17] : memref<2x4x256xf32, #tpu.memory_space<vmem>>, vector<2x4x256xf32>
    %32 = vector.shape_cast %30 : vector<2x4xf32> to vector<2x4x1xf32>
    %33 = vector.broadcast %32 : vector<2x4x1xf32> to vector<2x4x256xf32>
    %34 = arith.mulf %31, %33 : vector<2x4x256xf32>
    %c0_18 = arith.constant 0 : index
    %c0_19 = arith.constant 0 : index
    %c0_20 = arith.constant 0 : index
    %35 = vector.load %arg6[%c0_18, %c0_19, %c0_20] : memref<2x4x256xf32, #tpu.memory_space<vmem>>, vector<2x4x256xf32>
    tpu.vector_store %arg6[%c0_18, %c0_19, %c0_20], %34 {strides = array<i32>} : memref<2x4x256xf32, #tpu.memory_space<vmem>>, vector<2x4x256xf32>,
    return
  }
  func.func @transform_0(%arg0: i32) -> (i32, i32, i32) {
    %c0_i32 = arith.constant 0 : i32
    %c0_i32_0 = arith.constant 0 : i32
    %c0_i32_1 = arith.constant 0 : i32
    return %arg0, %c0_i32, %c0_i32_0 : i32, i32, i32
  }
  func.func @transform_1(%arg0: i32) -> (i32, i32) {
    %c0_i32 = arith.constant 0 : i32
    %c0_i32_0 = arith.constant 0 : i32
    %c0_i32_1 = arith.constant 0 : i32
    return %c0_i32, %c0_i32_0 : i32, i32
  }
  func.func @transform_2(%arg0: i32) -> (i32, i32) {
    %c0_i32 = arith.constant 0 : i32
    %c0_i32_0 = arith.constant 0 : i32
    %c0_i32_1 = arith.constant 0 : i32
    return %c0_i32, %c0_i32_0 : i32, i32
  }
  func.func @transform_3(%arg0: i32) -> (i32, i32) {
    %c0_i32 = arith.constant 0 : i32
    %c0_i32_0 = arith.constant 0 : i32
    %c0_i32_1 = arith.constant 0 : i32
    return %c0_i32, %c0_i32_0 : i32, i32
  }
  func.func @transform_4(%arg0: i32) -> (i32, i32) {
    %c0_i32 = arith.constant 0 : i32
    %c0_i32_0 = arith.constant 0 : i32
    %c0_i32_1 = arith.constant 0 : i32
    return %c0_i32, %c0_i32_0 : i32, i32
  }
  func.func @transform_5(%arg0: i32) -> (i32, i32, i32) {
    %c0_i32 = arith.constant 0 : i32
    %c0_i32_0 = arith.constant 0 : i32
    %c0_i32_1 = arith.constant 0 : i32
    return %arg0, %c0_i32, %c0_i32_0 : i32, i32, i32
  }
}

</mosaic_0001>

<llo_original>
// kernel: tpu_custom_call.1
$region0: #{tpu_custom_call.1}
  #allocation0 [shape = 'u32[]', space=smem, size = 0x4, offset = 0x4, fixed_abs, tag = 'smem constant byte address 0x4 - core index']
  #allocation1 [shape = 'u32[144,128]{1,0:T(1,128)}', space=vmem, size = 0x12000, scoped, tag = 'internal scratch']
  %s0 = inlined_call_operand.hbm [shape: f32[2,4,256], index: 0, kind: input, shape index: {}]
  %s1 = inlined_call_operand.vmem [shape: f32[4,2], index: 1, kind: input, shape index: {}]
  %s2 = inlined_call_operand.vmem [shape: f32[1,2], index: 2, kind: input, shape index: {}]
  %s3 = inlined_call_operand.vmem [shape: f32[2,4], index: 3, kind: input, shape index: {}]
  %s4 = inlined_call_operand.vmem [shape: f32[1,4], index: 4, kind: input, shape index: {}]
  %s5 = inlined_call_operand.hbm [shape: f32[2,4,256], index: 5, kind: output, shape index: {}]
  %s6 = sld [smem:[#allocation0]]
  $region34: #{tpu_custom_call.1} parent=0
    _
  %s8 = ssub.s32 1, %s6
  %s9 = scalar_select 0, %s8, %s6
  $region1: #{tpu_custom_call.1} parent=0
    #allocation2 [shape = 'u8[8192]{0}', space=vmem, size = 0x2000, scoped, tag = 'input window, operand 0, single buffered']
    #allocation3 [shape = 's32[1]{0}', space=sflag, size = 0x4, scoped, tag = 'scoped memory for tpu_custom_call.1']
    #allocation4 [shape = 's32[1]{0}', space=sflag, size = 0x4, scoped, tag = 'scoped memory for tpu_custom_call.1']
    #allocation5 [shape = 'u8[8192]{0}', space=vmem, size = 0x2000, scoped, tag = 'output window, operand 0, single buffered']
    %10 = vsyncpa [#allocation3], 0
    %11 = vsyncpa [#allocation4], 0
    // Predicated region
    $region2: #{tpu_custom_call.1} parent=1 // pred_check
      _
    $region3: #{tpu_custom_call.1} parent=1 // pred_check_branch
      %13 = sbr.rel (0) target = $region5
    $region4: #{tpu_custom_call.1} parent=1 // pred_region
      %s15 = ssub.s32 256, 256
      %16 = vsyncadd [#allocation3], %s15
      %s17 = sshll.u32 [#allocation2], 4
      %s18 = int_to_ptr.vmem [resolvable:$true] %s17
      %23 = dma.hbm_to_vmem [thread:$0]  %s0, 256, %s18, [#allocation3], 128, 128, 8
    $region5: #{tpu_custom_call.1} parent=1 // pred_fallthru
      _
    // Predicated region
    $region6: #{tpu_custom_call.1} parent=1 // pred_check
      _
    $region7: #{tpu_custom_call.1} parent=1 // pred_check_branch
      %25 = sbr.rel (0) target = $region9
    $region8: #{tpu_custom_call.1} parent=1 // pred_region
      _
    $region9: #{tpu_custom_call.1} parent=1 // pred_fallthru
      _
    // Predicated region
    $region10: #{tpu_custom_call.1} parent=1 // pred_check
      _
    $region11: #{tpu_custom_call.1} parent=1 // pred_check_branch
      %27 = sbr.rel (0) target = $region13
    $region12: #{tpu_custom_call.1} parent=1 // pred_region
      _
    $region13: #{tpu_custom_call.1} parent=1 // pred_fallthru
      _
    // Predicated region
    $region14: #{tpu_custom_call.1} parent=1 // pred_check
      _
    $region15: #{tpu_custom_call.1} parent=1 // pred_check_branch
      %29 = sbr.rel (0) target = $region17
    $region16: #{tpu_custom_call.1} parent=1 // pred_region
      _
    $region17: #{tpu_custom_call.1} parent=1 // pred_fallthru
      _
    // Predicated region
    $region18: #{tpu_custom_call.1} parent=1 // pred_check
      _
    $region19: #{tpu_custom_call.1} parent=1 // pred_check_branch
      %31 = sbr.rel (0) target = $region21
    $region20: #{tpu_custom_call.1} parent=1 // pred_region
      _
    $region21: #{tpu_custom_call.1} parent=1 // pred_fallthru
      _
    // Predicated region
    $region22: #{tpu_custom_call.1} parent=1 // pred_check
      _
    $region23: #{tpu_custom_call.1} parent=1 // pred_check_branch
      %33 = sbr.rel (0) target = $region25
    $region24: #{tpu_custom_call.1} parent=1 // pred_region
      %34 = dma.done [#allocation3], 256
    $region25: #{tpu_custom_call.1} parent=1 // pred_fallthru
      _
    %v35 = vld [vmem:[#allocation2] sm:$0xff]
    %v36 = vld [vmem:[#allocation2 + $0x8] sm:$0xff]
    %v39 = vcombine.high %v35, %v35
    %v40 = vcombine.high %v36, %v36
    %vm43 = vcmask 1043456
    %v44 = vsel %vm43, %v35, 0.0
    %v45 = vsel %vm43, %v39, 0.0
    %v46 = vadd.f32 %v44, %v45
    %47 = vadd.xlane.f32.xlu0 %v46
    %v48 = vpop.xlane.xlu0 %47
    %v49 = vsel %vm43, %v36, 0.0
    %v50 = vsel %vm43, %v40, 0.0
    %v51 = vadd.f32 %v49, %v50
    %52 = vadd.xlane.f32.xlu0 %v51
    %v53 = vpop.xlane.xlu0 %52
    %v54 = vmul.f32 %v48, 0.00390625
    %v55 = vmul.f32 %v53, 0.00390625
    %v56 = vld [vmem:[%s1] sm:$0xf]
    %v57 = vld [vmem:[%s3] sm:$0x3]
    %v58 = vld [vmem:[%s2] sm:$0x1]
    %v59 = vld [vmem:[%s4] sm:$0x1]
    %v60 = vmul.f32 %v54, %v56
    %v61 = vmul.f32 %v55, %v56
    %vm62 = vcmask 11264
    %v63 = vsel %vm62, %v60, 0.0
    %v64 = vrot.slane %v63, 4
    %v65 = vadd.f32 %v63, %v64
    %v66 = vrot.slane %v65, 2
    %v67 = vadd.f32 %v65, %v66
    %v68 = vrot.slane %v67, 1
    %v69 = vadd.f32 %v67, %v68
    %v70 = vsel %vm62, %v61, 0.0
    %v71 = vrot.slane %v70, 4
    %v72 = vadd.f32 %v70, %v71
    %v73 = vrot.slane %v72, 2
    %v74 = vadd.f32 %v72, %v73
    %v75 = vrot.slane %v74, 1
    %v76 = vadd.f32 %v74, %v75
    %v78 = vlaneseq
    %v79 = vshrl.u32 %v78, 7
    %v80 = vsub.s32 0, %v79
    %v81 = vrot.slane %v58, %v80
    %v83 = vadd.f32 %v69, %v81
    %v84 = vadd.f32 %v76, %v81
    %v85 = vmax.f32 %v83, 0.0
    %v86 = vmax.f32 %v84, 0.0
    %v87 = vlaneseq
    %v88 = vshrl.u32 %v87, 7
    %v89 = vsub.s32 0, %v88
    %v90 = vrot.slane %v85, %v89
    %92 = vbcast.lane.b32.xlu0 %v90, 256
    %v93 = vpop.permute.xlu0 %92
    %v94 = vlaneseq
    %v95 = vshrl.u32 %v94, 7
    %v96 = vsub.s32 0, %v95
    %v97 = vrot.slane %v86, %v96
    %99 = vbcast.lane.b32.xlu0 %v97, 256
    %v100 = vpop.permute.xlu0 %99
    %v101 = vmul.f32 %v93, %v57
    %v102 = vmul.f32 %v100, %v57
    %vm103 = vcmask 25600
    %v104 = vsel %vm103, %v101, 0.0
    %v105 = vrot.slane %v104, 4
    %v106 = vadd.f32 %v104, %v105
    %v107 = vrot.slane %v106, 2
    %v108 = vadd.f32 %v106, %v107
    %v109 = vrot.slane %v108, 1
    %v110 = vadd.f32 %v108, %v109
    %v111 = vsel %vm103, %v102, 0.0
    %v112 = vrot.slane %v111, 4
    %v113 = vadd.f32 %v111, %v112
    %v114 = vrot.slane %v113, 2
    %v115 = vadd.f32 %v113, %v114
    %v116 = vrot.slane %v115, 1
    %v117 = vadd.f32 %v115, %v116
    %v119 = vlaneseq
    %v120 = vshrl.u32 %v119, 7
    %v121 = vsub.s32 0, %v120
    %v122 = vrot.slane %v59, %v121
    %v124 = vadd.f32 %v110, %v122
    %v125 = vadd.f32 %v117, %v122
    %v126 = vxor.u32 %v124, 2147483648
    %v127 = vxor.u32 %v125, 2147483648
    %v128 = vmul.f32 %v126, 1.442695
    %v129 = vpow.pop %v128
    %v130 = vmul.f32 %v127, 1.442695
    %v131 = vpow.pop %v130
    %v132 = vadd.f32 %v129, 1.0
    %v133 = vadd.f32 %v131, 1.0
    %v134 = vrcp.pop %v132
    %v135 = vmul.f32 1.0, %v134
    %v136 = vrcp.pop %v133
    %v137 = vmul.f32 1.0, %v136
    %v138 = vlaneseq
    %v139 = vshrl.u32 %v138, 7
    %v140 = vsub.s32 0, %v139
    %v141 = vrot.slane %v135, %v140
    %143 = vbcast.lane.b32.xlu0 %v141, 256
    %v144 = vpop.permute.xlu0 %143
    %v145 = vlaneseq
    %v146 = vshrl.u32 %v145, 7
    %v147 = vsub.s32 0, %v146
    %v148 = vrot.slane %v137, %v147
    %150 = vbcast.lane.b32.xlu0 %v148, 256
    %v151 = vpop.permute.xlu0 %150
    %v155 = vunpack.c.l.s4 839922192
    %v156 = vunpack.c.0.s8 %v155
    %v157 = vlaneseq
    %v158 = vshrl.u32 %v157, 7
    %v159 = vsub.s32 %v156, %v158
    %v160 = vrot.slane %v144, %v159
    %v162 = vunpack.c.l.s4 839922192
    %v163 = vunpack.c.0.s8 %v162
    %v164 = vlaneseq
    %v165 = vshrl.u32 %v164, 7
    %v166 = vsub.s32 %v163, %v165
    %v167 = vrot.slane %v151, %v166
    %v170 = vmul.f32 %v35, %v160
    %v171 = vmul.f32 %v36, %v167
    %172 = vst [vmem:[#allocation5] sm:$0xff] %v170
    %173 = vst [vmem:[#allocation5 + $0x8] sm:$0xff] %v171
    // Predicated region
    $region26: #{tpu_custom_call.1} parent=1 // pred_check
      _
    $region27: #{tpu_custom_call.1} parent=1 // pred_check_branch
      %175 = sbr.rel (0) target = $region29
    $region28: #{tpu_custom_call.1} parent=1 // pred_region
      %s177 = ssub.s32 256, 256
      %178 = vsyncadd [#allocation4], %s177
      %s179 = sshll.u32 [#allocation5], 4
      %s180 = int_to_ptr.vmem [resolvable:$true] %s179
      %185 = dma.vmem_to_hbm [thread:$0]  %s180, 256, %s5, [#allocation4], 128, 128, 8
    $region29: #{tpu_custom_call.1} parent=1 // pred_fallthru
      _
    // Predicated region
    $region30: #{tpu_custom_call.1} parent=1 // pred_check
      _
    $region31: #{tpu_custom_call.1} parent=1 // pred_check_branch
      %187 = sbr.rel (0) target = $region33
    $region32: #{tpu_custom_call.1} parent=1 // pred_region
      %188 = dma.done [#allocation4], 256
    $region33: #{tpu_custom_call.1} parent=1 // pred_fallthru
      _
    %189 = vsyncpa [#allocation3], 1
    %190 = vsyncpa [#allocation4], 1

</llo_original>
